<compile_context>
chip_gen: v6e
topology: v6e:2x2x1
jax: 0.10.0
libtpu: 0.0.40
codegen_flags: <defaults>
</compile_context>

<pallas_src>
import jax
import jax.numpy as jnp
from jax.experimental import pallas as pl
from jax.experimental.pallas import tpu as pltpu


def _physical_vmem_bytes():
    """Best-effort physical VMEM query; conservative (v7x) fallback."""
    try:
        info = pltpu.get_tpu_info()
        for attr in ("vmem_capacity_bytes", "vmem_size_bytes", "vmem_bytes"):
            v = getattr(info, attr, None)
            if v:
                return int(v)
    except Exception:
        pass
    return 64 * 1024 * 1024  # v7x has 64 MiB per TensorCore -> safe everywhere


def _make_tv_kernel(P, B, L, W, ragged):
    """Kernel closure with the static plane geometry baked in."""

    def kernel(masks_ref, ia_ref, if_ref, out_ref):
        # Residual for this block of planes, accumulated in f32.
        r = ia_ref[...].astype(jnp.float32) - if_ref[...].astype(jnp.float32)  # (B, L)

        if ragged:
            # Only the last block has rows beyond P; the select costs ~1 VALU
            # op per vreg and safely discards any garbage in the tail rows.
            row = pl.program_id(0) * B + jax.lax.broadcasted_iota(
                jnp.int32, (B, 1), 0
            )
            r = jnp.where(row < P, r, 0.0)

        # Vertical diff r[p, i+1, j] - r[p, i, j]  ==  roll(flat, -W) - flat.
        # Horizontal diff r[p, i, j+1] - r[p, i, j] ==  roll(flat, -1) - flat.
        # XLU lane rolls keep everything on aligned tiles (XLU slot, not VALU).
        r_down = pltpu.roll(r, shift=L - W, axis=1)   # circular roll by -W
        r_right = pltpu.roll(r, shift=L - 1, axis=1)  # circular roll by -1
        dh = r_down - r
        dw = r_right - r

        # Host-precomputed seam masks, already scaled by 1/denom_h, 1/denom_w;
        # (1, L) rows broadcast over the B sublanes.
        mh = masks_ref[0:1, :]
        mw = masks_ref[1:2, :]

        # One fused reduce per multi-MiB block -> amortized XLU cost, single
        # accumulate chain, single lane-aligned partial output.
        partial = jnp.sum(dh * dh * mh + dw * dw * mw)
        out_ref[...] = jnp.broadcast_to(partial, (1, 1, 128)).astype(jnp.float32)

    return kernel


def tv_loss(IA, IF):
    """Pallas TPU implementation of TV_Loss.forward(IA, IF). Inputs are NCHW."""
    assert IA.shape == IF.shape
    N, C, H, W = IA.shape
    P = N * C
    L = H * W

    # Lane-dense layout: one flattened row per plane. No padding copies.
    ia = IA.reshape(P, L)
    if_ = IF.reshape(P, L)

    # Per-generation VMEM budget: ~3/4 of physical, clamped to [32, 96] MiB
    # (=> 48 MiB on v7x's 64 MiB/TC, 96 MiB on v5e/v6e's 128 MiB).
    phys_vmem = _physical_vmem_bytes()
    vmem_limit = int(min(max(32 * 1024 * 1024, phys_vmem * 3 // 4), 96 * 1024 * 1024))

    # Block sizing on the real working set: 2 inputs x 2 pipeline buffers in
    # the input dtype, plus ~4 block-sized f32 temporaries (r, rolled copies,
    # fused products) -> sized correctly even for bf16/fp16 inputs.
    itemsize = jnp.dtype(IA.dtype).itemsize
    bytes_per_plane = L * (4 * itemsize + 4 * 4)
    budget = int(vmem_limit * 0.75)
    b_cap = max(8, (budget // bytes_per_plane) // 8 * 8)
    # TODO(synk): planes so large that even B=8 overflows the VMEM budget would
    # need an extra L-tiling grid axis with a W-element halo for the vertical
    # diff; not needed for these shapes.

    if P <= 8:
        B = P  # block equals full array dim -> no multiple-of-8 requirement
    else:
        # Aim for >= 4 grid steps so the pipeline has work to overlap and the
        # "parallel" axis can shard across both TensorCores on v7x.
        b_par = max(8, (P // 4) // 8 * 8)
        B = int(min(b_cap, b_par))
    num_blocks = (P + B - 1) // B
    ragged = (P % B) != 0

    # Host-precomputed seam masks, pre-scaled by the mean denominators:
    #   hmask: 0 on the last image row (flat index >= (H-1)*W)
    #   wmask: 0 on the last column of each image row
    # (H==1 or W==1 gives 0/0 -> NaN, matching PyTorch's mean of an empty diff.)
    col = jnp.arange(L, dtype=jnp.int32)
    denom_h = jnp.float32(N * C * (H - 1) * W)
    denom_w = jnp.float32(N * C * H * (W - 1))
    hmask = (col < (H - 1) * W).astype(jnp.float32) / denom_h
    wmask = ((col % W) != (W - 1)).astype(jnp.float32) / denom_w
    masks = jnp.stack([hmask, wmask], axis=0)  # (2, L) f32

    out = pl.pallas_call(
        _make_tv_kernel(P, B, L, W, ragged),
        out_shape=jax.ShapeDtypeStruct((num_blocks, 1, 128), jnp.float32),
        grid_spec=pltpu.PrefetchScalarGridSpec(
            num_scalar_prefetch=0,
            grid=(num_blocks,),
            in_specs=[
                pl.BlockSpec((2, L), lambda i: (0, 0)),  # scaled seam masks (resident)
                pl.BlockSpec((B, L), lambda i: (i, 0)),  # IA planes
                pl.BlockSpec((B, L), lambda i: (i, 0)),  # IF planes
            ],
            out_specs=pl.BlockSpec((1, 1, 128), lambda i: (i, 0, 0)),
        ),
        compiler_params=pltpu.CompilerParams(
            # Independent per-block partials -> grid shards across both
            # TensorCores on v7x; harmless on single-TC v5e/v6e.
            dimension_semantics=("parallel",),
            vmem_limit_bytes=vmem_limit,
        ),
    )(masks, ia, if_)

    # Final cross-block reduce in the wrapper (masks were pre-scaled, so this
    # is already tv1 + tv2).
    return jnp.sum(out[:, 0, 0])


def tv_loss_ref(IA, IF):
    """Pure-JAX reference matching the PyTorch module exactly."""
    r = IA - IF
    tv1 = jnp.mean((r[:, :, 1:, :] - r[:, :, :-1, :]) ** 2)
    tv2 = jnp.mean((r[:, :, :, 1:] - r[:, :, :, :-1]) ** 2)
    return tv1 + tv2


if __name__ == "__main__":
    key = jax.random.PRNGKey(0)
    k1, k2 = jax.random.split(key)

    N, C, H, W = 2, 4, 16, 16
    IA = jax.random.normal(k1, (N, C, H, W), dtype=jnp.float32)
    IF = jax.random.normal(k2, (N, C, H, W), dtype=jnp.float32)

    out = tv_loss(IA, IF)
    out = jax.block_until_ready(out)

    ref = tv_loss_ref(IA, IF)
    assert jnp.allclose(out, ref, rtol=1e-5, atol=1e-5), (out, ref)

    print("KERNEL_OK")
</pallas_src>

<mosaic_0001>
module attributes {stable_mosaic.version = 11 : i64} {
  func.func @kernel(%arg0: i32, %arg1: memref<2x256xf32, #tpu.memory_space<vmem>>, %arg2: memref<8x256xf32, #tpu.memory_space<vmem>>, %arg3: memref<8x256xf32, #tpu.memory_space<vmem>>, %arg4: memref<1x1x128xf32, #tpu.memory_space<vmem>>) attributes {dimension_semantics = [#tpu.dimension_semantics<parallel>], iteration_bounds = array<i64: 1>, scalar_prefetch = 0 : i64, scratch_operands = 0 : i64, tpu.core_type = #tpu.core_type<tc>, window_params = [{pipeline_mode = #tpu.pipeline_mode<synchronous>, transform_indices = @transform_0, window_bounds = array<i64: 2, 256>}, {transform_indices = @transform_1, window_bounds = array<i64: 8, 256>}, {transform_indices = @transform_2, window_bounds = array<i64: 8, 256>}, {transform_indices = @transform_3, window_bounds = array<i64: 1, 1, 128>}]} {
    %c0 = arith.constant 0 : index
    %c0_0 = arith.constant 0 : index
    %0 = vector.load %arg2[%c0, %c0_0] : memref<8x256xf32, #tpu.memory_space<vmem>>, vector<8x256xf32>
    %c0_1 = arith.constant 0 : index
    %c0_2 = arith.constant 0 : index
    %1 = vector.load %arg3[%c0_1, %c0_2] : memref<8x256xf32, #tpu.memory_space<vmem>>, vector<8x256xf32>
    %2 = arith.subf %0, %1 : vector<8x256xf32>
    %c240_i32 = arith.constant 240 : i32
    %3 = tpu.dynamic_rotate %2 by %c240_i32 dim 1 : vector<8x256xf32>, i32 -> vector<8x256xf32>
    %c255_i32 = arith.constant 255 : i32
    %4 = tpu.dynamic_rotate %2 by %c255_i32 dim 1 : vector<8x256xf32>, i32 -> vector<8x256xf32>
    %5 = arith.subf %3, %2 : vector<8x256xf32>
    %6 = arith.subf %4, %2 : vector<8x256xf32>
    %c0_3 = arith.constant 0 : index
    %c0_4 = arith.constant 0 : index
    %7 = vector.load %arg1[%c0_3, %c0_4] : memref<2x256xf32, #tpu.memory_space<vmem>>, vector<1x256xf32>
    %c1 = arith.constant 1 : index
    %c0_5 = arith.constant 0 : index
    %8 = vector.load %arg1[%c1, %c0_5] : memref<2x256xf32, #tpu.memory_space<vmem>>, vector<1x256xf32>
    %9 = arith.mulf %5, %5 : vector<8x256xf32>
    %10 = vector.broadcast %7 : vector<1x256xf32> to vector<8x256xf32>
    %11 = arith.mulf %9, %10 : vector<8x256xf32>
    %12 = arith.mulf %6, %6 : vector<8x256xf32>
    %13 = vector.broadcast %8 : vector<1x256xf32> to vector<8x256xf32>
    %14 = arith.mulf %12, %13 : vector<8x256xf32>
    %15 = arith.addf %11, %14 : vector<8x256xf32>
    %16 = vector.shape_cast %15 : vector<8x256xf32> to vector<1x8x256xf32>
    %cst = arith.constant dense<0.000000e+00> : vector<1xf32>
    %17 = vector.multi_reduction <add>, %16, %cst [1, 2] : vector<1x8x256xf32> to vector<1xf32>
    %18 = vector.shape_cast %17 : vector<1xf32> to vector<1x1x1xf32>
    %19 = vector.extract %18[0, 0, 0] : f32 from vector<1x1x1xf32>
    %20 = vector.broadcast %19 : f32 to vector<1x1x128xf32>
    %c0_6 = arith.constant 0 : index
    %c0_7 = arith.constant 0 : index
    %c0_8 = arith.constant 0 : index
    %21 = vector.load %arg4[%c0_6, %c0_7, %c0_8] : memref<1x1x128xf32, #tpu.memory_space<vmem>>, vector<1x1x128xf32>
    tpu.vector_store %arg4[%c0_6, %c0_7, %c0_8], %20 {strides = array<i32>} : memref<1x1x128xf32, #tpu.memory_space<vmem>>, vector<1x1x128xf32>,
    return
  }
  func.func @transform_0(%arg0: i32) -> (i32, i32) {
    %c0_i32 = arith.constant 0 : i32
    %c0_i32_0 = arith.constant 0 : i32
    %c0_i32_1 = arith.constant 0 : i32
    return %c0_i32, %c0_i32_0 : i32, i32
  }
  func.func @transform_1(%arg0: i32) -> (i32, i32) {
    %c0_i32 = arith.constant 0 : i32
    %c0_i32_0 = arith.constant 0 : i32
    return %arg0, %c0_i32 : i32, i32
  }
  func.func @transform_2(%arg0: i32) -> (i32, i32) {
    %c0_i32 = arith.constant 0 : i32
    %c0_i32_0 = arith.constant 0 : i32
    return %arg0, %c0_i32 : i32, i32
  }
  func.func @transform_3(%arg0: i32) -> (i32, i32, i32) {
    %c0_i32 = arith.constant 0 : i32
    %c0_i32_0 = arith.constant 0 : i32
    %c0_i32_1 = arith.constant 0 : i32
    return %arg0, %c0_i32, %c0_i32_0 : i32, i32, i32
  }
}

</mosaic_0001>

<llo_original>
// kernel: tpu_custom_call.1
$region0: #{tpu_custom_call.1}
  #allocation0 [shape = 'u32[]', space=smem, size = 0x4, offset = 0x4, fixed_abs, tag = 'smem constant byte address 0x4 - core index']
  #allocation1 [shape = 'u32[144,128]{1,0:T(1,128)}', space=vmem, size = 0x12000, scoped, tag = 'internal scratch']
  %s0 = inlined_call_operand.hbm [shape: f32[2,256], index: 0, kind: input, shape index: {}]
  %s1 = inlined_call_operand.hbm [shape: f32[8,256], index: 1, kind: input, shape index: {}]
  %s2 = inlined_call_operand.hbm [shape: f32[8,256], index: 2, kind: input, shape index: {}]
  %s3 = inlined_call_operand.hbm [shape: f32[1,1,128], index: 3, kind: output, shape index: {}]
  %s4 = sld [smem:[#allocation0]]
  $region34: #{tpu_custom_call.1} parent=0
    _
  %s6 = ssub.s32 1, %s4
  %s7 = scalar_select 0, %s6, %s4
  $region1: #{tpu_custom_call.1} parent=0
    #allocation2 [shape = 'u8[2048]{0}', space=vmem, size = 0x800, scoped, tag = 'input window, operand 0, single buffered']
    #allocation3 [shape = 's32[1]{0}', space=sflag, size = 0x4, scoped, tag = 'scoped memory for tpu_custom_call.1']
    #allocation4 [shape = 's32[1]{0}', space=sflag, size = 0x4, scoped, tag = 'scoped memory for tpu_custom_call.1']
    #allocation5 [shape = 'u8[8192]{0}', space=vmem, size = 0x2000, scoped, tag = 'input window, operand 1, single buffered']
    #allocation6 [shape = 's32[1]{0}', space=sflag, size = 0x4, scoped, tag = 'scoped memory for tpu_custom_call.1']
    #allocation7 [shape = 'u8[8192]{0}', space=vmem, size = 0x2000, scoped, tag = 'input window, operand 2, single buffered']
    #allocation8 [shape = 'u8[512]{0}', space=vmem, size = 0x400, scoped, tag = 'output window, operand 0, single buffered']
    %8 = vsyncpa [#allocation3], 0
    %9 = vsyncpa [#allocation6], 0
    %10 = vsyncpa [#allocation4], 0
    // Predicated region
    $region2: #{tpu_custom_call.1} parent=1 // pred_check
      _
    $region3: #{tpu_custom_call.1} parent=1 // pred_check_branch
      %12 = sbr.rel (0) target = $region5
    $region4: #{tpu_custom_call.1} parent=1 // pred_region
      %s14 = ssub.s32 64, 64
      %15 = vsyncadd [#allocation3], %s14
      %s17 = sshll.u32 [#allocation2], 4
      %s18 = int_to_ptr.vmem [resolvable:$true] %s17
      %20 = dma.hbm_to_vmem [thread:$0]  %s0, 64, %s18, [#allocation3]
    $region5: #{tpu_custom_call.1} parent=1 // pred_fallthru
      _
    // Predicated region
    $region6: #{tpu_custom_call.1} parent=1 // pred_check
      _
    $region7: #{tpu_custom_call.1} parent=1 // pred_check_branch
      %22 = sbr.rel (0) target = $region9
    $region8: #{tpu_custom_call.1} parent=1 // pred_region
      %s24 = ssub.s32 256, 256
      %25 = vsyncadd [#allocation6], %s24
      %s27 = sshll.u32 [#allocation5], 4
      %s28 = int_to_ptr.vmem [resolvable:$true] %s27
      %30 = dma.hbm_to_vmem [thread:$0]  %s1, 256, %s28, [#allocation6]
    $region9: #{tpu_custom_call.1} parent=1 // pred_fallthru
      _
    // Predicated region
    $region10: #{tpu_custom_call.1} parent=1 // pred_check
      _
    $region11: #{tpu_custom_call.1} parent=1 // pred_check_branch
      %32 = sbr.rel (0) target = $region13
    $region12: #{tpu_custom_call.1} parent=1 // pred_region
      %s34 = ssub.s32 256, 256
      %35 = vsyncadd [#allocation6], %s34
      %s37 = sshll.u32 [#allocation7], 4
      %s38 = int_to_ptr.vmem [resolvable:$true] %s37
      %40 = dma.hbm_to_vmem [thread:$0]  %s2, 256, %s38, [#allocation6]
    $region13: #{tpu_custom_call.1} parent=1 // pred_fallthru
      _
    // Predicated region
    $region14: #{tpu_custom_call.1} parent=1 // pred_check
      _
    $region15: #{tpu_custom_call.1} parent=1 // pred_check_branch
      %42 = sbr.rel (0) target = $region17
    $region16: #{tpu_custom_call.1} parent=1 // pred_region
      %43 = dma.done [#allocation3], 64
    $region17: #{tpu_custom_call.1} parent=1 // pred_fallthru
      _
    // Predicated region
    $region18: #{tpu_custom_call.1} parent=1 // pred_check
      _
    $region19: #{tpu_custom_call.1} parent=1 // pred_check_branch
      %45 = sbr.rel (0) target = $region21
    $region20: #{tpu_custom_call.1} parent=1 // pred_region
      %46 = dma.done [#allocation6], 256
    $region21: #{tpu_custom_call.1} parent=1 // pred_fallthru
      _
    // Predicated region
    $region22: #{tpu_custom_call.1} parent=1 // pred_check
      _
    $region23: #{tpu_custom_call.1} parent=1 // pred_check_branch
      %48 = sbr.rel (0) target = $region25
    $region24: #{tpu_custom_call.1} parent=1 // pred_region
      %49 = dma.done [#allocation6], 256
    $region25: #{tpu_custom_call.1} parent=1 // pred_fallthru
      _
    %v50 = vld [vmem:[#allocation5] sm:$0xff]
    %v51 = vld [vmem:[#allocation5 + $0x8] sm:$0xff]
    %v52 = vld [vmem:[#allocation7] sm:$0xff]
    %v53 = vld [vmem:[#allocation7 + $0x8] sm:$0xff]
    %v54 = vsub.f32 %v50, %v52
    %v55 = vsub.f32 %v51, %v53
    %56 = vrot.lane.b32.xlu0 %v54, 112
    %v57 = vpop.permute.xlu0 %56
    %58 = vrot.lane.b32.xlu0 %v55, 112
    %v59 = vpop.permute.xlu0 %58
    %v60 = vlaneseq
    %v61 = vand.u32 %v60, 127
    %vm62 = vcmp.lt.s32.totalorder %v61, 112
    %v63 = vsel %vm62, %v57, %v59
    %v64 = vsel %vm62, %v59, %v57
    %65 = vrot.lane.b32.xlu0 %v54, 127
    %v66 = vpop.permute.xlu0 %65
    %67 = vrot.lane.b32.xlu0 %v55, 127
    %v68 = vpop.permute.xlu0 %67
    %vm69 = vcmp.lt.s32.totalorder %v61, 127
    %v70 = vsel %vm69, %v66, %v68
    %v71 = vsel %vm69, %v68, %v66
    %v72 = vsub.f32 %v63, %v54
    %v73 = vsub.f32 %v64, %v55
    %v74 = vsub.f32 %v70, %v54
    %v75 = vsub.f32 %v71, %v55
    %v76 = vld [vmem:[#allocation2] ss:$2 sm:$0x3]
    %s77 = scalar_lea.vmem [#allocation2], 1
    %v78 = vld [vmem:[%s77] ss:$2 sm:$0x3]
    %v79 = vmul.f32 %v72, %v72
    %v80 = vmul.f32 %v73, %v73
    %v82 = vlaneseq
    %v83 = vshrl.u32 %v82, 7
    %v84 = vsub.s32 0, %v83
    %v85 = vrot.slane %v76, %v84
    %v86 = vlaneseq
    %v87 = vshrl.u32 %v86, 7
    %v88 = vsub.s32 1, %v87
    %v89 = vrot.slane %v76, %v88
    %v92 = vmul.f32 %v79, %v85
    %v93 = vmul.f32 %v80, %v89
    %v94 = vmul.f32 %v74, %v74
    %v95 = vmul.f32 %v75, %v75
    %v97 = vlaneseq
    %v98 = vshrl.u32 %v97, 7
    %v99 = vsub.s32 0, %v98
    %v100 = vrot.slane %v78, %v99
    %v101 = vlaneseq
    %v102 = vshrl.u32 %v101, 7
    %v103 = vsub.s32 1, %v102
    %v104 = vrot.slane %v78, %v103
    %v107 = vmul.f32 %v94, %v100
    %v108 = vmul.f32 %v95, %v104
    %v109 = vadd.f32 %v92, %v107
    %v110 = vadd.f32 %v93, %v108
    %v111 = vadd.f32 %v109, %v110
    %112 = vadd.xlane.f32.xlu0 %v111
    %v113 = vpop.xlane.xlu0 %112
    %v114 = vrot.slane %v113, 4
    %v115 = vadd.f32 %v113, %v114
    %v116 = vrot.slane %v115, 2
    %v117 = vadd.f32 %v115, %v116
    %v118 = vrot.slane %v117, 1
    %v119 = vadd.f32 %v117, %v118
    %s120 = vtos %v119
    %v121 = vstv %s120
    %122 = vst [vmem:[#allocation8] sm:$0x1] %v121
    // Predicated region
    $region26: #{tpu_custom_call.1} parent=1 // pred_check
      _
    $region27: #{tpu_custom_call.1} parent=1 // pred_check_branch
      %124 = sbr.rel (0) target = $region29
    $region28: #{tpu_custom_call.1} parent=1 // pred_region
      %s126 = ssub.s32 16, 16
      %127 = vsyncadd [#allocation4], %s126
      %s129 = sshll.u32 [#allocation8], 4
      %s130 = int_to_ptr.vmem [resolvable:$true] %s129
      %132 = dma.vmem_to_hbm [thread:$0]  %s130, 16, %s3, [#allocation4]
    $region29: #{tpu_custom_call.1} parent=1 // pred_fallthru
      _
    // Predicated region
    $region30: #{tpu_custom_call.1} parent=1 // pred_check
      _
    $region31: #{tpu_custom_call.1} parent=1 // pred_check_branch
      %134 = sbr.rel (0) target = $region33
    $region32: #{tpu_custom_call.1} parent=1 // pred_region
      %135 = dma.done [#allocation4], 16
    $region33: #{tpu_custom_call.1} parent=1 // pred_fallthru
      _
    %136 = vsyncpa [#allocation3], 1
    %137 = vsyncpa [#allocation6], 1
    %138 = vsyncpa [#allocation4], 1

</llo_original>
